<compile_context>
chip_gen: v6e
topology: v6e:2x2x1
jax: 0.10.0
libtpu: 0.0.40
codegen_flags: <defaults>
</compile_context>

<pallas_src>
import jax
import jax.numpy as jnp
from jax.experimental import pallas as pl
from jax.experimental.pallas import tpu as pltpu


def _round_up(x, m):
    return ((x + m - 1) // m) * m


def res_classifier_kernel(x_ref, w1_ref, b1_ref, w2_ref, b2_ref, o_ref):
    # Cast x per-tile on the VPU (hides under the tile DMA); no-op on the f32 path.
    # Note: on the bf16 path this rounds the *input*, not just the MXU operand — fine for
    # classifier logits, documented for consumers.
    x = x_ref[...].astype(w1_ref.dtype)
    # fc1 (BatchNorm folded into w1/b1): Linear(in_dim -> hid_p), f32 accumulate.
    h = jnp.dot(x, w1_ref[...], preferred_element_type=jnp.float32) + b1_ref[...]
    # ReLU (f32 elementwise — v5e-safe, no bf16 VPU dependence).
    h = jnp.maximum(h, 0.0)
    # TODO(synk): Dropout(p=0.5) is identity here (eval semantics); train-mode dropout
    #             would use pltpu.prng_seed + pltpu.prng_random_bits and scale by 1/(1-p).
    # fc11: Linear(hid_p -> out_p); operand cast so the MXU sees bf16 x bf16 on the bf16
    # path (no-op on f32), f32 accumulation, store in o_ref.dtype (f32 or bf16).
    o_ref[...] = (jnp.dot(h.astype(w2_ref.dtype), w2_ref[...],
                          preferred_element_type=jnp.float32) + b2_ref[...]).astype(o_ref.dtype)


def prepare_params(params, *, eps=1e-5, use_bf16=False):
    """Fold BN into fc1 and zero-pad hidden/out dims to 128-lane boundaries (host side)."""
    w1, b1 = params["w1"], params["b1"]
    gamma, beta = params["gamma"], params["beta"]
    mean, var = params["mean"], params["var"]
    w2, b2 = params["w2"], params["b2"]

    scale = gamma * jax.lax.rsqrt(var.astype(jnp.float32) + eps)      # (1, hidden)
    w1f = w1.astype(jnp.float32) * scale                               # (in_dim, hidden)
    b1f = (b1.astype(jnp.float32) - mean) * scale + beta               # (1, hidden)

    in_dim, hidden = w1.shape
    out_dim = w2.shape[1]
    hid_p = _round_up(hidden, 128)
    out_p = _round_up(out_dim, 128)

    # Zero padding keeps logits exactly unchanged: padded hidden lanes see w1=0, b1=0
    # -> relu(0)=0, and the matching padded w2 rows are 0; padded output lanes are sliced off.
    w1p = jnp.zeros((in_dim, hid_p), jnp.float32).at[:, :hidden].set(w1f)
    b1p = jnp.zeros((1, hid_p), jnp.float32).at[:, :hidden].set(b1f)
    w2p = jnp.zeros((hid_p, out_p), jnp.float32).at[:hidden, :out_dim].set(w2.astype(jnp.float32))
    b2p = jnp.zeros((1, out_p), jnp.float32).at[:, :out_dim].set(b2.astype(jnp.float32))

    if use_bf16:
        # bf16 MXU operands are native on v5e, v6e AND v7x; halves weight DMA bytes.
        # Biases stay f32 so all elementwise math remains f32.
        w1p = w1p.astype(jnp.bfloat16)
        w2p = w2p.astype(jnp.bfloat16)
    return w1p, b1p, w2p, b2p, out_dim


def _choose_tile_b(N, target=1024):
    # Large tiles amortize per-grid-step overhead in this mem-bound kernel, but cap at
    # ceil(N/2) (rounded to a multiple of 8) so there are always >=2 grid steps and the
    # "parallel" axis actually feeds both TensorCores on v7x.
    half = _round_up(max(1, (N + 1) // 2), 8)
    return max(8, min(target, half))


def res_classifier_forward(x, params, *, tile_b=None, use_bf16=False,
                           out_dtype=jnp.float32, return_padded=False):
    N, in_dim = x.shape
    if tile_b is None:
        tile_b = _choose_tile_b(N)
    assert tile_b % 8 == 0, "tile_b must be a multiple of 8 (sublane granularity)"

    # Host-side batch padding so any N works; padded rows are sliced off below.
    n_pad = _round_up(N, tile_b)
    if n_pad != N:
        x = jnp.zeros((n_pad, in_dim), x.dtype).at[:N].set(x)

    w1p, b1p, w2p, b2p, out_dim = prepare_params(params, use_bf16=use_bf16)
    hid_p = w1p.shape[1]
    out_p = w2p.shape[1]

    full = lambda i: (0, 0)
    out_itemsize = jnp.dtype(out_dtype).itemsize
    flops = 2 * n_pad * in_dim * hid_p + 2 * n_pad * hid_p * out_p
    weight_bytes = int(w1p.size * w1p.dtype.itemsize + b1p.size * 4
                       + w2p.size * w2p.dtype.itemsize + b2p.size * 4)
    bytes_accessed = int(x.size * x.dtype.itemsize + weight_bytes + n_pad * out_p * out_itemsize)

    # Double-buffered per-step residency estimate; raise v5e's 16 MiB scoped default but
    # stay within every generation's physical VMEM (v7x = 64 MiB).
    per_step_bytes = 2 * (tile_b * in_dim * x.dtype.itemsize
                          + tile_b * out_p * out_itemsize
                          + weight_bytes)
    vmem_limit = int(min(64 << 20, max(32 << 20, per_step_bytes + (8 << 20))))

    out_padded = pl.pallas_call(
        res_classifier_kernel,
        out_shape=jax.ShapeDtypeStruct((n_pad, out_p), out_dtype),
        grid=(n_pad // tile_b,),
        in_specs=[
            pl.BlockSpec((tile_b, in_dim), lambda i: (i, 0)),   # x tile over batch (f32 in HBM)
            pl.BlockSpec((in_dim, hid_p), full),                # W1 (BN-folded, resident)
            pl.BlockSpec((1, hid_p), full),                     # b1 (BN-folded, f32)
            pl.BlockSpec((hid_p, out_p), full),                 # W2 (resident)
            pl.BlockSpec((1, out_p), full),                     # b2 (f32)
        ],
        out_specs=pl.BlockSpec((tile_b, out_p), lambda i: (i, 0)),  # lane-dense 128-wide slab
        compiler_params=pltpu.CompilerParams(
            dimension_semantics=("parallel",),
            vmem_limit_bytes=vmem_limit),
        cost_estimate=pl.CostEstimate(flops=flops, transcendentals=0,
                                      bytes_accessed=bytes_accessed),
    )(x, w1p, b1p, w2p, b2p)

    if return_padded:
        # Hand the lane-dense padded slab to a fused consumer (softmax/argmax/loss) and
        # avoid the extra XLA slice copy; valid logits live in [:N, :out_dim].
        return out_padded, out_dim
    return out_padded[:N, :out_dim]


def reference_forward(x, p):
    h = x @ p["w1"] + p["b1"]
    h = (h - p["mean"]) * jax.lax.rsqrt(p["var"] + 1e-5) * p["gamma"] + p["beta"]
    h = jnp.maximum(h, 0.0)
    return h @ p["w2"] + p["b2"]


def init_params(key, in_dim, hidden_dim, out_dim, dtype=jnp.float32):
    k1, k2, k3, k4, k5, k6, k7, k8 = jax.random.split(key, 8)
    # Deterministic init mirroring torch.nn.Linear's uniform(-1/sqrt(fan_in), 1/sqrt(fan_in)).
    b1_bound = 1.0 / jnp.sqrt(jnp.float32(in_dim))
    b2_bound = 1.0 / jnp.sqrt(jnp.float32(hidden_dim))
    return {
        "w1": jax.random.uniform(k1, (in_dim, hidden_dim), dtype, -b1_bound, b1_bound),
        "b1": jax.random.uniform(k2, (1, hidden_dim), dtype, -b1_bound, b1_bound),
        # BatchNorm1d affine params + running stats; perturbed so the BN fold is exercised.
        "gamma": jnp.ones((1, hidden_dim), dtype) + 0.1 * jax.random.normal(k3, (1, hidden_dim), dtype),
        "beta": 0.1 * jax.random.normal(k4, (1, hidden_dim), dtype),
        "mean": 0.05 * jax.random.normal(k5, (1, hidden_dim), dtype),
        "var": jnp.ones((1, hidden_dim), dtype),
        "w2": jax.random.uniform(k6, (hidden_dim, out_dim), dtype, -b2_bound, b2_bound),
        "b2": jax.random.uniform(k7, (1, out_dim), dtype, -b2_bound, b2_bound),
    }


if __name__ == "__main__":
    N, IN_DIM, HIDDEN_DIM, OUT_DIM = 16, 32, 76, 10

    key = jax.random.PRNGKey(0)
    kx, kp = jax.random.split(key)
    x = jax.random.normal(kx, (N, IN_DIM), jnp.float32)
    params = init_params(kp, IN_DIM, HIDDEN_DIM, OUT_DIM)

    ref = reference_forward(x, params)

    # f32 path: default tile selection gives two "parallel" grid steps (both TCs on v7x).
    logits = jax.block_until_ready(res_classifier_forward(x, params))
    assert logits.shape == (N, OUT_DIM)
    assert jnp.allclose(logits, ref, atol=1e-4, rtol=1e-4), "f32 mismatch vs pure-JAX reference"

    # bf16 path: bf16 weights + in-kernel x cast + bf16 output slab (halved writeback);
    # f32 MXU accumulation and f32 elementwise math throughout (valid on v5e/v6e/v7x).
    logits_bf16 = jax.block_until_ready(
        res_classifier_forward(x, params, use_bf16=True, out_dtype=jnp.bfloat16))
    assert logits_bf16.shape == (N, OUT_DIM)
    assert jnp.allclose(logits_bf16.astype(jnp.float32), ref, atol=5e-2, rtol=5e-2), \
        "bf16 mismatch vs reference"

    # Ragged batch (N=13, not a tile multiple): exercises host-side padding + slice-back.
    logits_odd = jax.block_until_ready(res_classifier_forward(x[:13], params))
    assert logits_odd.shape == (13, OUT_DIM)
    assert jnp.allclose(logits_odd, ref[:13], atol=1e-4, rtol=1e-4), "ragged-batch mismatch"

    print("KERNEL_OK")
</pallas_src>

<mosaic_0001>
module attributes {stable_mosaic.version = 11 : i64} {
  func.func @res_classifier_kernel(%arg0: i32, %arg1: memref<8x32xf32, #tpu.memory_space<vmem>>, %arg2: memref<32x128xf32, #tpu.memory_space<vmem>>, %arg3: memref<1x128xf32, #tpu.memory_space<vmem>>, %arg4: memref<128x128xf32, #tpu.memory_space<vmem>>, %arg5: memref<1x128xf32, #tpu.memory_space<vmem>>, %arg6: memref<8x128xf32, #tpu.memory_space<vmem>>) attributes {dimension_semantics = [#tpu.dimension_semantics<parallel>], iteration_bounds = array<i64: 2>, scalar_prefetch = 0 : i64, scratch_operands = 0 : i64, tpu.core_type = #tpu.core_type<tc>, window_params = [{transform_indices = @transform_0, window_bounds = array<i64: 8, 32>}, {pipeline_mode = #tpu.pipeline_mode<synchronous>, transform_indices = @transform_1, window_bounds = array<i64: 32, 128>}, {pipeline_mode = #tpu.pipeline_mode<synchronous>, transform_indices = @transform_2, window_bounds = array<i64: 1, 128>}, {pipeline_mode = #tpu.pipeline_mode<synchronous>, transform_indices = @transform_3, window_bounds = array<i64: 128, 128>}, {pipeline_mode = #tpu.pipeline_mode<synchronous>, transform_indices = @transform_4, window_bounds = array<i64: 1, 128>}, {transform_indices = @transform_5, window_bounds = array<i64: 8, 128>}]} {
    %c0 = arith.constant 0 : index
    %c0_0 = arith.constant 0 : index
    %0 = vector.load %arg1[%c0, %c0_0] : memref<8x32xf32, #tpu.memory_space<vmem>>, vector<8x32xf32>
    %c0_1 = arith.constant 0 : index
    %c0_2 = arith.constant 0 : index
    %1 = vector.load %arg2[%c0_1, %c0_2] : memref<32x128xf32, #tpu.memory_space<vmem>>, vector<32x128xf32>
    %cst = arith.constant dense<0.000000e+00> : vector<8x128xf32>
    %2 = tpu.matmul %0, %1, %cst {dimension_numbers = #tpu.dot_dimension_numbers<[1], [0], [0], [1], [0, 0, 1, 1], [], []>} : vector<8x32xf32>, vector<32x128xf32>, vector<8x128xf32> -> vector<8x128xf32>
    %c0_3 = arith.constant 0 : index
    %c0_4 = arith.constant 0 : index
    %3 = vector.load %arg3[%c0_3, %c0_4] : memref<1x128xf32, #tpu.memory_space<vmem>>, vector<1x128xf32>
    %4 = vector.broadcast %3 : vector<1x128xf32> to vector<8x128xf32>
    %5 = arith.addf %2, %4 : vector<8x128xf32>
    %cst_5 = arith.constant 0.000000e+00 : f32
    %6 = vector.broadcast %cst_5 : f32 to vector<8x128xf32>
    %7 = arith.maximumf %5, %6 : vector<8x128xf32>
    %c0_6 = arith.constant 0 : index
    %c0_7 = arith.constant 0 : index
    %8 = vector.load %arg4[%c0_6, %c0_7] : memref<128x128xf32, #tpu.memory_space<vmem>>, vector<128x128xf32>
    %cst_8 = arith.constant dense<0.000000e+00> : vector<8x128xf32>
    %9 = tpu.matmul %7, %8, %cst_8 {dimension_numbers = #tpu.dot_dimension_numbers<[1], [0], [0], [1], [0, 0, 1, 1], [], []>} : vector<8x128xf32>, vector<128x128xf32>, vector<8x128xf32> -> vector<8x128xf32>
    %c0_9 = arith.constant 0 : index
    %c0_10 = arith.constant 0 : index
    %10 = vector.load %arg5[%c0_9, %c0_10] : memref<1x128xf32, #tpu.memory_space<vmem>>, vector<1x128xf32>
    %11 = vector.broadcast %10 : vector<1x128xf32> to vector<8x128xf32>
    %12 = arith.addf %9, %11 : vector<8x128xf32>
    %c0_11 = arith.constant 0 : index
    %c0_12 = arith.constant 0 : index
    %13 = vector.load %arg6[%c0_11, %c0_12] : memref<8x128xf32, #tpu.memory_space<vmem>>, vector<8x128xf32>
    tpu.vector_store %arg6[%c0_11, %c0_12], %12 {strides = array<i32>} : memref<8x128xf32, #tpu.memory_space<vmem>>, vector<8x128xf32>,
    return
  }
  func.func @transform_0(%arg0: i32) -> (i32, i32) {
    %c0_i32 = arith.constant 0 : i32
    %c0_i32_0 = arith.constant 0 : i32
    return %arg0, %c0_i32 : i32, i32
  }
  func.func @transform_1(%arg0: i32) -> (i32, i32) {
    %c0_i32 = arith.constant 0 : i32
    %c0_i32_0 = arith.constant 0 : i32
    %c0_i32_1 = arith.constant 0 : i32
    return %c0_i32, %c0_i32_0 : i32, i32
  }
  func.func @transform_2(%arg0: i32) -> (i32, i32) {
    %c0_i32 = arith.constant 0 : i32
    %c0_i32_0 = arith.constant 0 : i32
    %c0_i32_1 = arith.constant 0 : i32
    return %c0_i32, %c0_i32_0 : i32, i32
  }
  func.func @transform_3(%arg0: i32) -> (i32, i32) {
    %c0_i32 = arith.constant 0 : i32
    %c0_i32_0 = arith.constant 0 : i32
    %c0_i32_1 = arith.constant 0 : i32
    return %c0_i32, %c0_i32_0 : i32, i32
  }
  func.func @transform_4(%arg0: i32) -> (i32, i32) {
    %c0_i32 = arith.constant 0 : i32
    %c0_i32_0 = arith.constant 0 : i32
    %c0_i32_1 = arith.constant 0 : i32
    return %c0_i32, %c0_i32_0 : i32, i32
  }
  func.func @transform_5(%arg0: i32) -> (i32, i32) {
    %c0_i32 = arith.constant 0 : i32
    %c0_i32_0 = arith.constant 0 : i32
    return %arg0, %c0_i32 : i32, i32
  }
}

</mosaic_0001>

<llo_original>
// kernel: tpu_custom_call.1
$region0: #{tpu_custom_call.1}
  #allocation0 [shape = 'u32[]', space=smem, size = 0x4, offset = 0x4, fixed_abs, tag = 'smem constant byte address 0x4 - core index']
  #allocation1 [shape = 'u32[144,128]{1,0:T(1,128)}', space=vmem, size = 0x12000, scoped, tag = 'internal scratch']
  %s0 = inlined_call_operand.hbm [shape: f32[16,32], index: 0, kind: input, shape index: {}]
  %s1 = inlined_call_operand.hbm [shape: f32[32,128], index: 1, kind: input, shape index: {}]
  %s2 = inlined_call_operand.vmem [shape: f32[1,128], index: 2, kind: input, shape index: {}]
  %s3 = inlined_call_operand.hbm [shape: f32[128,128], index: 3, kind: input, shape index: {}]
  %s4 = inlined_call_operand.vmem [shape: f32[1,128], index: 4, kind: input, shape index: {}]
  %s5 = inlined_call_operand.hbm [shape: f32[16,128], index: 5, kind: output, shape index: {}]
  %s6 = sld [smem:[#allocation0]]
  $region65: #{tpu_custom_call.1} parent=0
    _
  %s8 = ssub.s32 1, %s6
  %s9 = scalar_select 0, %s8, %s6
  $region1: #{tpu_custom_call.1} parent=0
    #allocation2 [shape = 'u8[8192]{0}', space=vmem, size = 0x2000, scoped, tag = 'input window, operand 0']
    #allocation3 [shape = 's32[2]{0}', space=sflag, size = 0x8, scoped, tag = 'scoped memory for tpu_custom_call.1']
    #allocation4 [shape = 's32[2]{0}', space=sflag, size = 0x8, scoped, tag = 'scoped memory for tpu_custom_call.1']
    #allocation5 [shape = 'u8[16384]{0}', space=vmem, size = 0x4000, scoped, tag = 'input window, operand 1, single buffered']
    #allocation6 [shape = 's32[1]{0}', space=sflag, size = 0x4, scoped, tag = 'scoped memory for tpu_custom_call.1']
    #allocation7 [shape = 'u8[65536]{0}', space=vmem, size = 0x10000, scoped, tag = 'input window, operand 3, single buffered']
    #allocation8 [shape = 'u8[8192]{0}', space=vmem, size = 0x2000, scoped, tag = 'output window, operand 0']
    %10 = vsyncpa [#allocation3], 0
    %s11 = scalar_lea.sflag [#allocation3], 1
    %12 = vsyncpa %s11, 0
    %13 = vsyncpa [#allocation6], 0
    %14 = vsyncpa [#allocation4], 0
    %s15 = scalar_lea.sflag [#allocation4], 1
    %16 = vsyncpa %s15, 0
    loop: start=0, step=1, limit=4
    $region2: #{tpu_custom_call.1} parent=1 // loop_pre_header
      _
    $region3: #{tpu_custom_call.1} parent=1 // loop_header
      %s18 = sphi 0, %s22
      %p19 = scmp.ge.s32.totalorder %s18, 4
      %s28 = sphi 0, %s30
      %s31 = sphi 0, %s28
      %s32 = sphi 0, %s31
      %s48 = sphi 0, %s32
      %s52 = sphi 0, %s52
      %s54 = sphi 0, %s52
      %s55 = sphi 0, %s54
      %s69 = sphi 0, %s55
      %s73 = sphi 0, %s73
      %s75 = sphi 0, %s73
      %s76 = sphi 0, %s75
      %s90 = sphi 0, %s76
      %s94 = sphi 0, %s94
      %s96 = sphi 0, %s94
      %s97 = sphi 0, %s96
      %s111 = sphi 0, %s97
      %s115 = sphi 0, %s115
      %s117 = sphi 0, %s115
      %s118 = sphi 0, %s117
      %s132 = sphi 0, %s118
      %s138 = sphi 0, %s140
      %s141 = sphi 0, %s138
      %s142 = sphi 0, %s141
      %s158 = sphi 0, %s142
    $region4: #{tpu_custom_call.1} parent=1 // loop_header_branch
      %21 = sbr.rel (%p19) target = $region8
    $region5: #{tpu_custom_call.1} parent=1 // loop_body
      %s23 = ssub.s32 %s18, 1
      %s24 = ssub.s32 %s18, 2
      %s25 = sadd.s32 %s18, 1
      %s26 = ssub.s32 %s18, %s25
      %p27 = scmp.eq.s32.totalorder %s26, 0
      %s29 = sadd.s32 %s28, 1
      %s30 = scalar_select %p27, %s28, %s29
      %p33 = pneg %p27
      %p34 = scmp.eq.s32.totalorder %s18, 1
      %p35 = por %p33, %p34
      %p36 = scmp.ne.s32.totalorder %s28, %s31
      %p37 = scmp.eq.s32.totalorder %s18, 0
      %p38 = por %p36, %p37
      %p39 = scmp.ne.s32.totalorder %s28, %s31
      %p40 = scmp.eq.s32.totalorder %s23, 1
      %p41 = por %p39, %p40
      %p42 = scmp.ne.s32.totalorder %s31, %s32
      %p43 = scmp.eq.s32.totalorder %s23, 0
      %p44 = por %p42, %p43
      %p45 = scmp.ne.s32.totalorder %s31, %s32
      %p46 = scmp.eq.s32.totalorder %s24, 1
      %p47 = por %p45, %p46
      %p49 = scmp.ne.s32.totalorder %s32, %s48
      %p50 = scmp.eq.s32.totalorder %s24, 0
      %p51 = por %p49, %p50
      %s53 = sadd.s32 %s52, 1
      %p56 = scmp.eq.s32.totalorder %s18, 1
      %p57 = scmp.ne.s32.totalorder %s52, %s54
      %p58 = scmp.eq.s32.totalorder %s18, 0
      %p59 = por %p57, %p58
      %p60 = scmp.ne.s32.totalorder %s52, %s54
      %p61 = scmp.eq.s32.totalorder %s23, 1
      %p62 = por %p60, %p61
      %p63 = scmp.ne.s32.totalorder %s54, %s55
      %p64 = scmp.eq.s32.totalorder %s23, 0
      %p65 = por %p63, %p64
      %p66 = scmp.ne.s32.totalorder %s54, %s55
      %p67 = scmp.eq.s32.totalorder %s24, 1
      %p68 = por %p66, %p67
      %p70 = scmp.ne.s32.totalorder %s55, %s69
      %p71 = scmp.eq.s32.totalorder %s24, 0
      %p72 = por %p70, %p71
      %s74 = sadd.s32 %s73, 1
      %p77 = scmp.eq.s32.totalorder %s18, 1
      %p78 = scmp.ne.s32.totalorder %s73, %s75
      %p79 = scmp.eq.s32.totalorder %s18, 0
      %p80 = por %p78, %p79
      %p81 = scmp.ne.s32.totalorder %s73, %s75
      %p82 = scmp.eq.s32.totalorder %s23, 1
      %p83 = por %p81, %p82
      %p84 = scmp.ne.s32.totalorder %s75, %s76
      %p85 = scmp.eq.s32.totalorder %s23, 0
      %p86 = por %p84, %p85
      %p87 = scmp.ne.s32.totalorder %s75, %s76
      %p88 = scmp.eq.s32.totalorder %s24, 1
      %p89 = por %p87, %p88
      %p91 = scmp.ne.s32.totalorder %s76, %s90
      %p92 = scmp.eq.s32.totalorder %s24, 0
      %p93 = por %p91, %p92
      %s95 = sadd.s32 %s94, 1
      %p98 = scmp.eq.s32.totalorder %s18, 1
      %p99 = scmp.ne.s32.totalorder %s94, %s96
      %p100 = scmp.eq.s32.totalorder %s18, 0
      %p101 = por %p99, %p100
      %p102 = scmp.ne.s32.totalorder %s94, %s96
      %p103 = scmp.eq.s32.totalorder %s23, 1
      %p104 = por %p102, %p103
      %p105 = scmp.ne.s32.totalorder %s96, %s97
      %p106 = scmp.eq.s32.totalorder %s23, 0
      %p107 = por %p105, %p106
      %p108 = scmp.ne.s32.totalorder %s96, %s97
      %p109 = scmp.eq.s32.totalorder %s24, 1
      %p110 = por %p108, %p109
      %p112 = scmp.ne.s32.totalorder %s97, %s111
      %p113 = scmp.eq.s32.totalorder %s24, 0
      %p114 = por %p112, %p113
      %s116 = sadd.s32 %s115, 1
      %p119 = scmp.eq.s32.totalorder %s18, 1
      %p120 = scmp.ne.s32.totalorder %s115, %s117
      %p121 = scmp.eq.s32.totalorder %s18, 0
      %p122 = por %p120, %p121
      %p123 = scmp.ne.s32.totalorder %s115, %s117
      %p124 = scmp.eq.s32.totalorder %s23, 1
      %p125 = por %p123, %p124
      %p126 = scmp.ne.s32.totalorder %s117, %s118
      %p127 = scmp.eq.s32.totalorder %s23, 0
      %p128 = por %p126, %p127
      %p129 = scmp.ne.s32.totalorder %s117, %s118
      %p130 = scmp.eq.s32.totalorder %s24, 1
      %p131 = por %p129, %p130
      %p133 = scmp.ne.s32.totalorder %s118, %s132
      %p134 = scmp.eq.s32.totalorder %s24, 0
      %p135 = por %p133, %p134
      %s136 = ssub.s32 %s18, %s25
      %p137 = scmp.eq.s32.totalorder %s136, 0
      %s139 = sadd.s32 %s138, 1
      %s140 = scalar_select %p137, %s138, %s139
      %p143 = pneg %p137
      %p144 = scmp.eq.s32.totalorder %s18, 1
      %p145 = por %p143, %p144
      %p146 = scmp.ne.s32.totalorder %s138, %s141
      %p147 = scmp.eq.s32.totalorder %s18, 0
      %p148 = por %p146, %p147
      %p149 = scmp.ne.s32.totalorder %s138, %s141
      %p150 = scmp.eq.s32.totalorder %s23, 1
      %p151 = por %p149, %p150
      %p152 = scmp.ne.s32.totalorder %s141, %s142
      %p153 = scmp.eq.s32.totalorder %s23, 0
      %p154 = por %p152, %p153
      %p155 = scmp.ne.s32.totalorder %s141, %s142
      %p156 = scmp.eq.s32.totalorder %s24, 1
      %p157 = por %p155, %p156
      %p159 = scmp.ne.s32.totalorder %s142, %s158
      %p160 = scmp.eq.s32.totalorder %s24, 0
      %p161 = por %p159, %p160
      %p162 = scmp.le.s32.totalorder 1, %s18
      %p163 = scmp.lt.s32.totalorder %s18, 3
      %p164 = pnand %p162, %p163
      %p165 = pneg %p164
      // Predicated region
      $region9: #{tpu_custom_call.1} parent=5 // pred_check
        _
      $region10: #{tpu_custom_call.1} parent=5 // pred_check_branch
        %167 = sbr.rel (%p164) target = $region12
      $region11: #{tpu_custom_call.1} parent=5 // pred_region
        %s168 = ssub.s32 %s18, 1
        // Predicated region
        $region13: #{tpu_custom_call.1} parent=11 // pred_check
          %p169 = pneg %p65
        $region14: #{tpu_custom_call.1} parent=11 // pred_check_branch
          %171 = sbr.rel (%p169) target = $region16
        $region15: #{tpu_custom_call.1} parent=11 // pred_region
          %s173 = ssub.s32 512, 512
          %174 = vsyncadd [#allocation6], %s173
          %s175 = sshll.u32 [#allocation5], 4
          %s176 = int_to_ptr.vmem [resolvable:$true] %s175
          %181 = dma.hbm_to_vmem [thread:$0]  %s1, 512, %s176, [#allocation6], 128, 128, 8
        $region16: #{tpu_custom_call.1} parent=11 // pred_fallthru
          _
        // Predicated region
        $region17: #{tpu_custom_call.1} parent=11 // pred_check
          %p182 = pneg %p86
        $region18: #{tpu_custom_call.1} parent=11 // pred_check_branch
          %184 = sbr.rel (%p182) target = $region20
        $region19: #{tpu_custom_call.1} parent=11 // pred_region
          _
        $region20: #{tpu_custom_call.1} parent=11 // pred_fallthru
          _
        // Predicated region
        $region21: #{tpu_custom_call.1} parent=11 // pred_check
          %p185 = pneg %p107
        $region22: #{tpu_custom_call.1} parent=11 // pred_check_branch
          %187 = sbr.rel (%p185) target = $region24
        $region23: #{tpu_custom_call.1} parent=11 // pred_region
          %s189 = ssub.s32 2048, 2048
          %190 = vsyncadd [#allocation6], %s189
          %s191 = sshll.u32 [#allocation7], 4
          %s192 = int_to_ptr.vmem [resolvable:$true] %s191
          %197 = dma.hbm_to_vmem [thread:$0]  %s3, 2048, %s192, [#allocation6], 128, 128, 8
        $region24: #{tpu_custom_call.1} parent=11 // pred_fallthru
          _
        // Predicated region
        $region25: #{tpu_custom_call.1} parent=11 // pred_check
          %p198 = pneg %p128
        $region26: #{tpu_custom_call.1} parent=11 // pred_check_branch
          %200 = sbr.rel (%p198) target = $region28
        $region27: #{tpu_custom_call.1} parent=11 // pred_region
          _
        $region28: #{tpu_custom_call.1} parent=11 // pred_fallthru
          _
      $region12: #{tpu_custom_call.1} parent=5 // pred_fallthru
        _
      %p201 = scmp.lt.s32.totalorder %s18, 2
      // Predicated region
      $region29: #{tpu_custom_call.1} parent=5 // pred_check
        %p202 = pneg %p201
      $region30: #{tpu_custom_call.1} parent=5 // pred_check_branch
        %204 = sbr.rel (%p202) target = $region32
      $region31: #{tpu_custom_call.1} parent=5 // pred_region
        // Predicated region
        $region33: #{tpu_custom_call.1} parent=31 // pred_check
          %p205 = pneg %p38
        $region34: #{tpu_custom_call.1} parent=31 // pred_check_branch
          %207 = sbr.rel (%p205) target = $region36
        $region35: #{tpu_custom_call.1} parent=31 // pred_region
          %s208 = sand.u32 %s28, 1
          %s209 = scalar_lea.sflag [#allocation3], %s208
          %s210 = sand.u32 %s28, 1
          %s211 = smul.addr %s210, 8
          %s212 = scalar_lea.vmem [#allocation2], %s211
          %s214 = ssub.s32 128, 128
          %215 = vsyncadd %s209, %s214
          %s216 = smul.addr %s18, 128
          %s217 = scalar_lea.hbm %s0, %s216
          %s219 = sshll.u32 %s212, 4
          %s220 = int_to_ptr.vmem [resolvable:$true] %s219
          %222 = dma.hbm_to_vmem [thread:$0]  %s217, 128, %s220, %s209
        $region36: #{tpu_custom_call.1} parent=31 // pred_fallthru
          _
      $region32: #{tpu_custom_call.1} parent=5 // pred_fallthru
        _
      %p223 = scmp.le.s32.totalorder 1, %s18
      %p224 = scmp.lt.s32.totalorder %s18, 3
      %p225 = pnand %p223, %p224
      %p226 = pneg %p225
      // Predicated region
      $region37: #{tpu_custom_call.1} parent=5 // pred_check
        _
      $region38: #{tpu_custom_call.1} parent=5 // pred_check_branch
        %228 = sbr.rel (%p225) target = $region40
      $region39: #{tpu_custom_call.1} parent=5 // pred_region
        %s229 = ssub.s32 %s18, 1
        %s230 = sand.u32 %s31, 1
        %s231 = scalar_lea.sflag [#allocation3], %s230
        %s232 = sand.u32 %s31, 1
        %s233 = smul.addr %s232, 8
        %s234 = scalar_lea.vmem [#allocation2], %s233
        // Predicated region
        $region41: #{tpu_custom_call.1} parent=39 // pred_check
          %p235 = pneg %p44
        $region42: #{tpu_custom_call.1} parent=39 // pred_check_branch
          %237 = sbr.rel (%p235) target = $region44
        $region43: #{tpu_custom_call.1} parent=39 // pred_region
          %238 = dma.done %s231, 128
        $region44: #{tpu_custom_call.1} parent=39 // pred_fallthru
          _
        // Predicated region
        $region45: #{tpu_custom_call.1} parent=39 // pred_check
          %p239 = pneg %p65
        $region46: #{tpu_custom_call.1} parent=39 // pred_check_branch
          %241 = sbr.rel (%p239) target = $region48
        $region47: #{tpu_custom_call.1} parent=39 // pred_region
          %242 = dma.done [#allocation6], 512
        $region48: #{tpu_custom_call.1} parent=39 // pred_fallthru
          _
        // Predicated region
        $region49: #{tpu_custom_call.1} parent=39 // pred_check
          %p243 = pneg %p107
        $region50: #{tpu_custom_call.1} parent=39 // pred_check_branch
          %245 = sbr.rel (%p243) target = $region52
        $region51: #{tpu_custom_call.1} parent=39 // pred_region
          %246 = dma.done [#allocation6], 2048
        $region52: #{tpu_custom_call.1} parent=39 // pred_fallthru
          _
        %s247 = sand.u32 %s31, 1
        %s248 = scalar_lea.sflag [#allocation3], %s247
        %s249 = sand.u32 %s31, 1
        %s250 = smul.addr %s249, 8
        %s251 = scalar_lea.vmem [#allocation2], %s250
        %p252 = pneg %p44
        %p253 = pneg %p41
        %p254 = pneg %p65
        %p255 = pneg %p62
        %p256 = pneg %p86
        %p257 = pneg %p83
        %p258 = pneg %p107
        %p259 = pneg %p104
        %p260 = pneg %p128
        %p261 = pneg %p125
        %p262 = pneg %p154
        %p263 = pneg %p151
        %s264 = sand.u32 %s141, 1
        %s265 = scalar_lea.sflag [#allocation4], %s264
        %s266 = sand.u32 %s141, 1
        %s267 = smul.addr %s266, 8
        %s268 = scalar_lea.vmem [#allocation8], %s267
        %v269 = vld [vmem:[%s234] sm:$0xff]
        %v270 = vld [vmem:[#allocation5] sm:$0xff]
        %v271 = vld [vmem:[#allocation5 + $0x8] sm:$0xff]
        %v272 = vld [vmem:[#allocation5 + $0x10] sm:$0xff]
        %v273 = vld [vmem:[#allocation5 + $0x18] sm:$0xff]
        %v274 = vld [vmem:[%s2] sm:$0x1]
        %v276 = vlaneseq
        %v277 = vshrl.u32 %v276, 7
        %v278 = vsub.s32 0, %v277
        %v279 = vrot.slane %v274, %v278
        %vm281 = vcmask 261120
        %v283 = vsel %vm281, %v269, 0
        %285 = vmatprep.subr.mxu0 0.0
        %286 = vmatpush1.msra.mxu0 0.0
        %287 = vmatprep.subr.mxu0 0.0
        %288 = vmatpush1.msra.mxu0 0.0
        %289 = vmatprep.subr.mxu0 0.0
        %290 = vmatpush1.msra.mxu0 0.0
        %291 = vmatprep.subr.mxu0 0.0
        %292 = vmatpush1.msra.mxu0 0.0
        %293 = vmatprep.subr.mxu0 0.0
        %294 = vmatpush1.msra.mxu0 0.0
        %295 = vmatprep.subr.mxu0 0.0
        %296 = vmatpush1.msra.mxu0 0.0
        %297 = vmatprep.subr.mxu0 0.0
        %298 = vmatpush1.msra.mxu0 0.0
        %299 = vmatprep.subr.mxu0 0.0
        %300 = vmatpush1.msra.mxu0 0.0
        %301 = vmatprep.subr.mxu0 0.0
        %302 = vmatpush1.msra.mxu0 0.0
        %303 = vmatprep.subr.mxu0 0.0
        %304 = vmatpush1.msra.mxu0 0.0
        %305 = vmatprep.subr.mxu0 0.0
        %306 = vmatpush1.msra.mxu0 0.0
        %307 = vmatprep.subr.mxu0 0.0
        %308 = vmatpush1.msra.mxu0 0.0
        %309 = vmatprep.subr.mxu0 0.0
        %310 = vmatpush1.msra.mxu0 %v273
        %311 = vmatprep.subr.mxu0 0.0
        %312 = vmatpush1.msra.mxu0 %v272
        %313 = vmatprep.subr.mxu0 0.0
        %314 = vmatpush1.msra.mxu0 %v271
        %315 = vmatprep.subr.mxu0 0.0
        %316 = vmatpush1.msra.mxu0 %v270
        %317 = vmatprep.subr.mxu0 0.0
        %318 = vmatpush2.msra.mxu0 0.0
        %319 = vmatprep.subr.mxu0 0.0
        %320 = vmatpush2.msra.mxu0 0.0
        %321 = vmatprep.subr.mxu0 0.0
        %322 = vmatpush2.msra.mxu0 0.0
        %323 = vmatprep.subr.mxu0 0.0
        %324 = vmatpush2.msra.mxu0 0.0
        %325 = vmatprep.subr.mxu0 0.0
        %326 = vmatpush2.msra.mxu0 0.0
        %327 = vmatprep.subr.mxu0 0.0
        %328 = vmatpush2.msra.mxu0 0.0
        %329 = vmatprep.subr.mxu0 0.0
        %330 = vmatpush2.msra.mxu0 0.0
        %331 = vmatprep.subr.mxu0 0.0
        %332 = vmatpush2.msra.mxu0 0.0
        %333 = vmatprep.subr.mxu0 0.0
        %334 = vmatpush2.msra.mxu0 0.0
        %335 = vmatprep.subr.mxu0 0.0
        %336 = vmatpush2.msra.mxu0 0.0
        %337 = vmatprep.subr.mxu0 0.0
        %338 = vmatpush2.msra.mxu0 0.0
        %339 = vmatprep.subr.mxu0 0.0
        %340 = vmatpush2.msra.mxu0 0.0
        %341 = vmatprep.subr.mxu0 0.0
        %342 = vmatpush2.msra.mxu0 0.0
        %343 = vmatprep.subr.mxu0 0.0
        %344 = vmatpush2.msra.mxu0 0.0
        %345 = vmatprep.subr.mxu0 0.0
        %346 = vmatpush2.msra.mxu0 0.0
        %347 = vmatprep.subr.mxu0 0.0
        %348 = vmatpush2.msra.mxu0 0.0
        %349 = vmatprep.mubr.f32.mxu0 0.0
        %350 = vmatmul.mubr.f32.gmra.mxu0 %v283
        %v351 = vpop.f32.mrf.mxu0
        %v352 = vadd.f32 %v279, %v351
        %v353 = vpop.f32.mrf.mxu0
        %354 = vdwg.mxu0
        %v355 = vmax.f32 %v352, 0.0
        %v356 = vld [vmem:[#allocation7] sm:$0xff]
        %v357 = vld [vmem:[#allocation7 + $0x8] sm:$0xff]
        %v358 = vld [vmem:[#allocation7 + $0x10] sm:$0xff]
        %v359 = vld [vmem:[#allocation7 + $0x18] sm:$0xff]
        %v360 = vld [vmem:[#allocation7 + $0x20] sm:$0xff]
        %v361 = vld [vmem:[#allocation7 + $0x28] sm:$0xff]
        %v362 = vld [vmem:[#allocation7 + $0x30] sm:$0xff]
        %v363 = vld [vmem:[#allocation7 + $0x38] sm:$0xff]
        %v364 = vld [vmem:[#allocation7 + $0x40] sm:$0xff]
        %v365 = vld [vmem:[#allocation7 + $0x48] sm:$0xff]
        %v366 = vld [vmem:[#allocation7 + $0x50] sm:$0xff]
        %v367 = vld [vmem:[#allocation7 + $0x58] sm:$0xff]
        %v368 = vld [vmem:[#allocation7 + $0x60] sm:$0xff]
        %v369 = vld [vmem:[#allocation7 + $0x68] sm:$0xff]
        %v370 = vld [vmem:[#allocation7 + $0x70] sm:$0xff]
        %v371 = vld [vmem:[#allocation7 + $0x78] sm:$0xff]
        %v372 = vld [vmem:[%s4] sm:$0x1]
        %v374 = vlaneseq
        %v375 = vshrl.u32 %v374, 7
        %v376 = vsub.s32 0, %v375
        %v377 = vrot.slane %v372, %v376
        %379 = vmatprep.subr.mxu0 0.0
        %380 = vmatpush1.msra.mxu0 %v371
        %381 = vmatprep.subr.mxu0 0.0
        %382 = vmatpush1.msra.mxu0 %v370
        %383 = vmatprep.subr.mxu0 0.0
        %384 = vmatpush1.msra.mxu0 %v369
        %385 = vmatprep.subr.mxu0 0.0
        %386 = vmatpush1.msra.mxu0 %v368
        %387 = vmatprep.subr.mxu0 0.0
        %388 = vmatpush1.msra.mxu0 %v367
        %389 = vmatprep.subr.mxu0 0.0
        %390 = vmatpush1.msra.mxu0 %v366
        %391 = vmatprep.subr.mxu0 0.0
        %392 = vmatpush1.msra.mxu0 %v365
        %393 = vmatprep.subr.mxu0 0.0
        %394 = vmatpush1.msra.mxu0 %v364
        %395 = vmatprep.subr.mxu0 0.0
        %396 = vmatpush1.msra.mxu0 %v363
        %397 = vmatprep.subr.mxu0 0.0
        %398 = vmatpush1.msra.mxu0 %v362
        %399 = vmatprep.subr.mxu0 0.0
        %400 = vmatpush1.msra.mxu0 %v361
        %401 = vmatprep.subr.mxu0 0.0
        %402 = vmatpush1.msra.mxu0 %v360
        %403 = vmatprep.subr.mxu0 0.0
        %404 = vmatpush1.msra.mxu0 %v359
        %405 = vmatprep.subr.mxu0 0.0
        %406 = vmatpush1.msra.mxu0 %v358
        %407 = vmatprep.subr.mxu0 0.0
        %408 = vmatpush1.msra.mxu0 %v357
        %409 = vmatprep.subr.mxu0 0.0
        %410 = vmatpush1.msra.mxu0 %v356
        %411 = vmatprep.subr.mxu0 0.0
        %412 = vmatpush2.msra.mxu0 0.0
        %413 = vmatprep.subr.mxu0 0.0
        %414 = vmatpush2.msra.mxu0 0.0
        %415 = vmatprep.subr.mxu0 0.0
        %416 = vmatpush2.msra.mxu0 0.0
        %417 = vmatprep.subr.mxu0 0.0
        %418 = vmatpush2.msra.mxu0 0.0
        %419 = vmatprep.subr.mxu0 0.0
        %420 = vmatpush2.msra.mxu0 0.0
        %421 = vmatprep.subr.mxu0 0.0
        %422 = vmatpush2.msra.mxu0 0.0
        %423 = vmatprep.subr.mxu0 0.0
        %424 = vmatpush2.msra.mxu0 0.0
        %425 = vmatprep.subr.mxu0 0.0
        %426 = vmatpush2.msra.mxu0 0.0
        %427 = vmatprep.subr.mxu0 0.0
        %428 = vmatpush2.msra.mxu0 0.0
        %429 = vmatprep.subr.mxu0 0.0
        %430 = vmatpush2.msra.mxu0 0.0
        %431 = vmatprep.subr.mxu0 0.0
        %432 = vmatpush2.msra.mxu0 0.0
        %433 = vmatprep.subr.mxu0 0.0
        %434 = vmatpush2.msra.mxu0 0.0
        %435 = vmatprep.subr.mxu0 0.0
        %436 = vmatpush2.msra.mxu0 0.0
        %437 = vmatprep.subr.mxu0 0.0
        %438 = vmatpush2.msra.mxu0 0.0
        %439 = vmatprep.subr.mxu0 0.0
        %440 = vmatpush2.msra.mxu0 0.0
        %441 = vmatprep.subr.mxu0 0.0
        %442 = vmatpush2.msra.mxu0 0.0
        %443 = vmatprep.mubr.f32.mxu0 0.0
        %444 = vmatmul.mubr.f32.gmra.mxu0 %v355
        %v445 = vpop.f32.mrf.mxu0
        %v446 = vadd.f32 %v377, %v445
        %v447 = vpop.f32.mrf.mxu0
        %448 = vdwg.mxu0
        %449 = vst [vmem:[%s268] sm:$0xff] %v446
        %s450 = sand.u32 %s141, 1
        %s451 = scalar_lea.sflag [#allocation4], %s450
        %s452 = sand.u32 %s141, 1
        %s453 = smul.addr %s452, 8
        %s454 = scalar_lea.vmem [#allocation8], %s453
        // Predicated region
        $region53: #{tpu_custom_call.1} parent=39 // pred_check
          %p455 = pneg %p151
        $region54: #{tpu_custom_call.1} parent=39 // pred_check_branch
          %457 = sbr.rel (%p455) target = $region56
        $region55: #{tpu_custom_call.1} parent=39 // pred_region
          %s459 = ssub.s32 128, 128
          %460 = vsyncadd %s451, %s459
          %s461 = smul.addr %s23, 128
          %s462 = scalar_lea.hbm %s5, %s461
          %s464 = sshll.u32 %s454, 4
          %s465 = int_to_ptr.vmem [resolvable:$true] %s464
          %467 = dma.vmem_to_hbm [thread:$0]  %s465, 128, %s462, %s451
        $region56: #{tpu_custom_call.1} parent=39 // pred_fallthru
          _
      $region40: #{tpu_custom_call.1} parent=5 // pred_fallthru
        _
      %p468 = scmp.le.s32.totalorder 2, %s18
      // Predicated region
      $region57: #{tpu_custom_call.1} parent=5 // pred_check
        %p469 = pneg %p468
      $region58: #{tpu_custom_call.1} parent=5 // pred_check_branch
        %471 = sbr.rel (%p469) target = $region60
      $region59: #{tpu_custom_call.1} parent=5 // pred_region
        %s472 = ssub.s32 %s18, 2
        // Predicated region
        $region61: #{tpu_custom_call.1} parent=59 // pred_check
          %p473 = pneg %p157
        $region62: #{tpu_custom_call.1} parent=59 // pred_check_branch
          %475 = sbr.rel (%p473) target = $region64
        $region63: #{tpu_custom_call.1} parent=59 // pred_region
          %s476 = sand.u32 %s142, 1
          %s477 = scalar_lea.sflag [#allocation4], %s476
          %s478 = sand.u32 %s142, 1
          %s479 = smul.addr %s478, 8
          %s480 = scalar_lea.vmem [#allocation8], %s479
          %481 = dma.done %s477, 128
        $region64: #{tpu_custom_call.1} parent=59 // pred_fallthru
          _
      $region60: #{tpu_custom_call.1} parent=5 // pred_fallthru
        _
    $region6: #{tpu_custom_call.1} parent=1 // loop_footer
      %s22 = sadd.s32 1, %s18
    $region7: #{tpu_custom_call.1} parent=1 // loop_footer_branch
      %17 = sbr.rel target = $region3
    $region8: #{tpu_custom_call.1} parent=1 // loop_exit
      _
    %482 = vsyncpa [#allocation3], 1
    %s483 = scalar_lea.sflag [#allocation3], 1
    %484 = vsyncpa %s483, 1
    %485 = vsyncpa [#allocation6], 1
    %486 = vsyncpa [#allocation4], 1
    %s487 = scalar_lea.sflag [#allocation4], 1
    %488 = vsyncpa %s487, 1

</llo_original>
